<compile_context>
chip_gen: v6e
topology: v6e:2x2x1
jax: 0.10.0
libtpu: 0.0.40
codegen_flags: <defaults>
</compile_context>

<pallas_src>
import functools
import math

import jax
import jax.numpy as jnp
from jax import lax
from jax.experimental import pallas as pl
from jax.experimental.pallas import tpu as pltpu


def _round_up(x, m):
    return (x + m - 1) // m * m


def _attention_kernel(x_ref, w_ref, o_ref, *, seq_len, hidden_pad):
    """One grid step: a block of `bb` batch elements, full sequence.

    x_ref : (bb, s_pad, d_pad)        f32
    w_ref : (d_pad, 3*hidden_pad)     bf16  fused [Wq*scale | Wk | Wv]
    o_ref : (bb, s_pad, hidden_pad)   f32
    """
    bb, s_pad, d_pad = x_ref.shape

    # Fused QKV projection: one (bb*s_pad, d_pad) x (d_pad, 3H) MXU matmul,
    # bf16 operands, f32 accumulation.  The reshape only folds leading dims
    # (s_pad % 8 == 0, d_pad % 128 == 0) so it is layout-free.
    x2d = x_ref[...].reshape(bb * s_pad, d_pad).astype(jnp.bfloat16)
    qkv = jnp.dot(x2d, w_ref[...], preferred_element_type=jnp.float32)
    qkv = qkv.reshape(bb, s_pad, 3 * hidden_pad)

    # 128-lane-aligned slices of the fused projection result.
    # 1/sqrt(H) is already folded into the Wq columns of the fused weight.
    q = qkv[:, :, :hidden_pad]
    k = qkv[:, :, hidden_pad:2 * hidden_pad]
    v = qkv[:, :, 2 * hidden_pad:]

    # scores = q @ k^T without materializing a transpose: contract the last
    # axis of both operands, batched over the batch-block axis.
    scores = lax.dot_general(
        q.astype(jnp.bfloat16), k.astype(jnp.bfloat16),
        dimension_numbers=(((2,), (2,)), ((0,), (0,))),
        preferred_element_type=jnp.float32)      # (bb, s_pad, s_pad) f32

    if s_pad > seq_len:  # static check; mask padded key columns when present
        key_idx = lax.broadcasted_iota(jnp.int32, (1, 1, s_pad), 2)
        scores = jnp.where(key_idx < seq_len, scores, -1e30)

    # Numerically-stable softmax; all elementwise math in f32.
    scores = scores - jnp.max(scores, axis=-1, keepdims=True)
    p = jnp.exp(scores)
    inv_l = pl.reciprocal(jnp.sum(p, axis=-1, keepdims=True), approx=True)

    # TODO(synk): for large S the full (S,S) scores block should be replaced
    # by flash-style KV tiling (especially on v7x with 64 MiB VMEM).
    out = lax.dot_general(
        p.astype(jnp.bfloat16), v.astype(jnp.bfloat16),
        dimension_numbers=(((2,), (1,)), ((0,), (0,))),
        preferred_element_type=jnp.float32)      # (bb, s_pad, hidden_pad) f32

    o_ref[...] = (out * inv_l).astype(o_ref.dtype)


def self_attention(x, wq_t, wk_t, wv_t, *, batch_block=None):
    """SelfAttention forward.

    x    : (B, S, D) float32
    w*_t : (D, H) float32 -- nn.Linear weights already transposed (x @ w*_t)
    Returns (B, S, H) float32.
    """
    B, S, D = x.shape
    H = wq_t.shape[1]

    # Pad to TPU-friendly tiles: lanes (last dims) to 128, sublanes to 8.
    d_pad = _round_up(D, 128)
    h_pad = _round_up(H, 128)
    s_pad = _round_up(S, 8)

    # >= 2 parallel grid steps whenever B >= 2 so v7x megacore can split the
    # batch across its two TensorCores; each step still sees bb*S rows.
    if batch_block is None:
        batch_block = max(1, B // 2)
    num_blocks = (B + batch_block - 1) // batch_block
    b_pad = num_blocks * batch_block

    def pad_to(a, shape):
        return jnp.pad(a, [(0, t - s) for s, t in zip(a.shape, shape)])

    x_p = pad_to(x, (b_pad, s_pad, d_pad))

    # Fused [Wq*scale | Wk | Wv]; each segment padded to (d_pad, h_pad) so the
    # q/k/v slices inside the kernel land on 128-lane boundaries.  The softmax
    # scale 1/sqrt(H) (true hidden dim, matching torch) is folded into Wq, and
    # the fused weight is pre-cast to bf16: half the weight DMA bytes and no
    # per-step cast / scale work inside the kernel.
    scale = 1.0 / math.sqrt(H)
    w_fused = jnp.concatenate(
        [pad_to(wq_t * scale, (d_pad, h_pad)),
         pad_to(wk_t, (d_pad, h_pad)),
         pad_to(wv_t, (d_pad, h_pad))], axis=1).astype(jnp.bfloat16)

    kernel = functools.partial(
        _attention_kernel, seq_len=S, hidden_pad=h_pad)

    out_p = pl.pallas_call(
        kernel,
        out_shape=jax.ShapeDtypeStruct((b_pad, s_pad, h_pad), x.dtype),
        grid=(num_blocks,),
        in_specs=[
            pl.BlockSpec((batch_block, s_pad, d_pad), lambda i: (i, 0, 0)),
            pl.BlockSpec((d_pad, 3 * h_pad), lambda i: (0, 0)),
        ],
        out_specs=pl.BlockSpec((batch_block, s_pad, h_pad),
                               lambda i: (i, 0, 0)),
        compiler_params=pltpu.CompilerParams(
            dimension_semantics=("parallel",)),
    )(x_p, w_fused)

    return out_p[:B, :S, :H]


def self_attention_ref(x, wq_t, wk_t, wv_t):
    """Pure-JAX f32 reference matching the PyTorch forward pass."""
    q = x @ wq_t
    k = x @ wk_t
    v = x @ wv_t
    scores = jnp.einsum("bsh,bth->bst", q, k) / jnp.sqrt(
        jnp.float32(k.shape[-1]))
    w = jax.nn.softmax(scores, axis=-1)
    return jnp.einsum("bst,bth->bsh", w, v)


if __name__ == "__main__":
    B, S, D = 2, 8, 32
    H = D  # hidden_dim defaults to input_dim

    key = jax.random.PRNGKey(0)
    kx, kq, kk, kv = jax.random.split(key, 4)

    x = jax.random.normal(kx, (B, S, D), dtype=jnp.float32)

    # nn.Linear(input_dim, hidden_dim, bias=False) weight shape is (H, D);
    # forward computes x @ W.T.  Kaiming-uniform-style init, pre-transposed.
    bound = 1.0 / math.sqrt(D)
    wq = jax.random.uniform(kq, (H, D), jnp.float32, -bound, bound)
    wk = jax.random.uniform(kk, (H, D), jnp.float32, -bound, bound)
    wv = jax.random.uniform(kv, (H, D), jnp.float32, -bound, bound)

    out = self_attention(x, wq.T, wk.T, wv.T)
    out = jax.block_until_ready(out)

    ref = self_attention_ref(x, wq.T, wk.T, wv.T)
    assert out.shape == (B, S, H)
    # bf16 MXU operands + approx reciprocal -> ~1e-3 level error; 2e-2 budget.
    assert jnp.allclose(out, ref, atol=2e-2, rtol=2e-2), "mismatch vs reference"

    print("KERNEL_OK")
</pallas_src>

<mosaic_0001>
module attributes {stable_mosaic.version = 11 : i64} {
  func.func @_attention_kernel(%arg0: i32, %arg1: memref<1x8x128xf32, #tpu.memory_space<vmem>>, %arg2: memref<128x384xbf16, #tpu.memory_space<vmem>>, %arg3: memref<1x8x128xf32, #tpu.memory_space<vmem>>) attributes {dimension_semantics = [#tpu.dimension_semantics<parallel>], iteration_bounds = array<i64: 2>, scalar_prefetch = 0 : i64, scratch_operands = 0 : i64, tpu.core_type = #tpu.core_type<tc>, window_params = [{transform_indices = @transform_0, window_bounds = array<i64: 1, 8, 128>}, {pipeline_mode = #tpu.pipeline_mode<synchronous>, transform_indices = @transform_1, window_bounds = array<i64: 128, 384>}, {transform_indices = @transform_2, window_bounds = array<i64: 1, 8, 128>}]} {
    %c0 = arith.constant 0 : index
    %c0_0 = arith.constant 0 : index
    %c0_1 = arith.constant 0 : index
    %0 = vector.load %arg1[%c0, %c0_0, %c0_1] : memref<1x8x128xf32, #tpu.memory_space<vmem>>, vector<1x8x128xf32>
    %1 = vector.shape_cast %0 : vector<1x8x128xf32> to vector<8x128xf32>
    %2 = arith.truncf %1 : vector<8x128xf32> to vector<8x128xbf16>
    %c0_2 = arith.constant 0 : index
    %c0_3 = arith.constant 0 : index
    %3 = vector.load %arg2[%c0_2, %c0_3] : memref<128x384xbf16, #tpu.memory_space<vmem>>, vector<128x384xbf16>
    %cst = arith.constant dense<0.000000e+00> : vector<8x384xf32>
    %4 = tpu.matmul %2, %3, %cst {dimension_numbers = #tpu.dot_dimension_numbers<[1], [0], [0], [1], [0, 0, 1, 1], [], []>} : vector<8x128xbf16>, vector<128x384xbf16>, vector<8x384xf32> -> vector<8x384xf32>
    %5 = vector.shape_cast %4 : vector<8x384xf32> to vector<1x8x384xf32>
    %6 = vector.extract_strided_slice %5 {offsets = [0, 0, 0], sizes = [1, 8, 128], strides = [1, 1, 1]} : vector<1x8x384xf32> to vector<1x8x128xf32>
    %7 = vector.extract_strided_slice %5 {offsets = [0, 0, 128], sizes = [1, 8, 128], strides = [1, 1, 1]} : vector<1x8x384xf32> to vector<1x8x128xf32>
    %8 = vector.extract_strided_slice %5 {offsets = [0, 0, 256], sizes = [1, 8, 128], strides = [1, 1, 1]} : vector<1x8x384xf32> to vector<1x8x128xf32>
    %9 = arith.truncf %6 : vector<1x8x128xf32> to vector<1x8x128xbf16>
    %10 = arith.truncf %7 : vector<1x8x128xf32> to vector<1x8x128xbf16>
    %cst_4 = arith.constant dense<0.000000e+00> : vector<1x8x8xf32>
    %11 = tpu.matmul %9, %10, %cst_4 {dimension_numbers = #tpu.dot_dimension_numbers<[2], [2], [1], [1], [0, 0, 0, 1, 1, 1], [0], [0]>} : vector<1x8x128xbf16>, vector<1x8x128xbf16>, vector<1x8x8xf32> -> vector<1x8x8xf32>
    %cst_5 = arith.constant dense<0xFF800000> : vector<1x8xf32>
    %12 = vector.multi_reduction <maximumf>, %11, %cst_5 [2] : vector<1x8x8xf32> to vector<1x8xf32>
    %13 = vector.shape_cast %12 : vector<1x8xf32> to vector<1x8x1xf32>
    %14 = vector.broadcast %13 : vector<1x8x1xf32> to vector<1x8x8xf32>
    %15 = arith.subf %11, %14 : vector<1x8x8xf32>
    %16 = math.exp %15 : vector<1x8x8xf32>
    %cst_6 = arith.constant dense<0.000000e+00> : vector<1x8xf32>
    %17 = vector.multi_reduction <add>, %16, %cst_6 [2] : vector<1x8x8xf32> to vector<1x8xf32>
    %18 = vector.shape_cast %17 : vector<1x8xf32> to vector<1x8x1xf32>
    %19 = tpu.reciprocal %18 {approx = true} : vector<1x8x1xf32> -> vector<1x8x1xf32>
    %20 = arith.truncf %16 : vector<1x8x8xf32> to vector<1x8x8xbf16>
    %21 = arith.truncf %8 : vector<1x8x128xf32> to vector<1x8x128xbf16>
    %cst_7 = arith.constant dense<0.000000e+00> : vector<1x8x128xf32>
    %22 = tpu.matmul %20, %21, %cst_7 {dimension_numbers = #tpu.dot_dimension_numbers<[2], [1], [1], [2], [0, 0, 0, 1, 1, 2], [0], [0]>} : vector<1x8x8xbf16>, vector<1x8x128xbf16>, vector<1x8x128xf32> -> vector<1x8x128xf32>
    %23 = vector.broadcast %19 : vector<1x8x1xf32> to vector<1x8x128xf32>
    %24 = arith.mulf %22, %23 : vector<1x8x128xf32>
    %c0_8 = arith.constant 0 : index
    %c0_9 = arith.constant 0 : index
    %c0_10 = arith.constant 0 : index
    %25 = vector.load %arg3[%c0_8, %c0_9, %c0_10] : memref<1x8x128xf32, #tpu.memory_space<vmem>>, vector<1x8x128xf32>
    tpu.vector_store %arg3[%c0_8, %c0_9, %c0_10], %24 {strides = array<i32>} : memref<1x8x128xf32, #tpu.memory_space<vmem>>, vector<1x8x128xf32>,
    return
  }
  func.func @transform_0(%arg0: i32) -> (i32, i32, i32) {
    %c0_i32 = arith.constant 0 : i32
    %c0_i32_0 = arith.constant 0 : i32
    %c0_i32_1 = arith.constant 0 : i32
    return %arg0, %c0_i32, %c0_i32_0 : i32, i32, i32
  }
  func.func @transform_1(%arg0: i32) -> (i32, i32) {
    %c0_i32 = arith.constant 0 : i32
    %c0_i32_0 = arith.constant 0 : i32
    %c0_i32_1 = arith.constant 0 : i32
    return %c0_i32, %c0_i32_0 : i32, i32
  }
  func.func @transform_2(%arg0: i32) -> (i32, i32, i32) {
    %c0_i32 = arith.constant 0 : i32
    %c0_i32_0 = arith.constant 0 : i32
    %c0_i32_1 = arith.constant 0 : i32
    return %arg0, %c0_i32, %c0_i32_0 : i32, i32, i32
  }
}

</mosaic_0001>

<llo_original>
// kernel: tpu_custom_call.1
$region0: #{tpu_custom_call.1}
  #allocation0 [shape = 'u32[]', space=smem, size = 0x4, offset = 0x4, fixed_abs, tag = 'smem constant byte address 0x4 - core index']
  #allocation1 [shape = 'u32[144,128]{1,0:T(1,128)}', space=vmem, size = 0x12000, scoped, tag = 'internal scratch']
  %s0 = inlined_call_operand.hbm [shape: f32[2,8,128], index: 0, kind: input, shape index: {}]
  %s1 = inlined_call_operand.hbm [shape: bf16[128,384], index: 1, kind: input, shape index: {}]
  %s2 = inlined_call_operand.hbm [shape: f32[2,8,128], index: 2, kind: output, shape index: {}]
  %s3 = sld [smem:[#allocation0]]
  $region49: #{tpu_custom_call.1} parent=0
    _
  %s5 = ssub.s32 1, %s3
  %s6 = scalar_select 0, %s5, %s3
  $region1: #{tpu_custom_call.1} parent=0
    #allocation2 [shape = 'u8[8192]{0}', space=vmem, size = 0x2000, scoped, tag = 'input window, operand 0']
    #allocation3 [shape = 's32[2]{0}', space=sflag, size = 0x8, scoped, tag = 'scoped memory for tpu_custom_call.1']
    #allocation4 [shape = 's32[2]{0}', space=sflag, size = 0x8, scoped, tag = 'scoped memory for tpu_custom_call.1']
    #allocation5 [shape = 'u8[98304]{0}', space=vmem, size = 0x18000, scoped, tag = 'input window, operand 1, single buffered']
    #allocation6 [shape = 's32[1]{0}', space=sflag, size = 0x4, scoped, tag = 'scoped memory for tpu_custom_call.1']
    #allocation7 [shape = 'u8[8192]{0}', space=vmem, size = 0x2000, scoped, tag = 'output window, operand 0']
    %7 = vsyncpa [#allocation3], 0
    %s8 = scalar_lea.sflag [#allocation3], 1
    %9 = vsyncpa %s8, 0
    %10 = vsyncpa [#allocation6], 0
    %11 = vsyncpa [#allocation4], 0
    %s12 = scalar_lea.sflag [#allocation4], 1
    %13 = vsyncpa %s12, 0
    loop: start=0, step=1, limit=4
    $region2: #{tpu_custom_call.1} parent=1 // loop_pre_header
      _
    $region3: #{tpu_custom_call.1} parent=1 // loop_header
      %s15 = sphi 0, %s19
      %p16 = scmp.ge.s32.totalorder %s15, 4
      %s25 = sphi 0, %s27
      %s28 = sphi 0, %s25
      %s29 = sphi 0, %s28
      %s45 = sphi 0, %s29
      %s49 = sphi 0, %s49
      %s51 = sphi 0, %s49
      %s52 = sphi 0, %s51
      %s66 = sphi 0, %s52
      %s72 = sphi 0, %s74
      %s75 = sphi 0, %s72
      %s76 = sphi 0, %s75
      %s92 = sphi 0, %s76
    $region4: #{tpu_custom_call.1} parent=1 // loop_header_branch
      %18 = sbr.rel (%p16) target = $region8
    $region5: #{tpu_custom_call.1} parent=1 // loop_body
      %s20 = ssub.s32 %s15, 1
      %s21 = ssub.s32 %s15, 2
      %s22 = sadd.s32 %s15, 1
      %s23 = ssub.s32 %s15, %s22
      %p24 = scmp.eq.s32.totalorder %s23, 0
      %s26 = sadd.s32 %s25, 1
      %s27 = scalar_select %p24, %s25, %s26
      %p30 = pneg %p24
      %p31 = scmp.eq.s32.totalorder %s15, 1
      %p32 = por %p30, %p31
      %p33 = scmp.ne.s32.totalorder %s25, %s28
      %p34 = scmp.eq.s32.totalorder %s15, 0
      %p35 = por %p33, %p34
      %p36 = scmp.ne.s32.totalorder %s25, %s28
      %p37 = scmp.eq.s32.totalorder %s20, 1
      %p38 = por %p36, %p37
      %p39 = scmp.ne.s32.totalorder %s28, %s29
      %p40 = scmp.eq.s32.totalorder %s20, 0
      %p41 = por %p39, %p40
      %p42 = scmp.ne.s32.totalorder %s28, %s29
      %p43 = scmp.eq.s32.totalorder %s21, 1
      %p44 = por %p42, %p43
      %p46 = scmp.ne.s32.totalorder %s29, %s45
      %p47 = scmp.eq.s32.totalorder %s21, 0
      %p48 = por %p46, %p47
      %s50 = sadd.s32 %s49, 1
      %p53 = scmp.eq.s32.totalorder %s15, 1
      %p54 = scmp.ne.s32.totalorder %s49, %s51
      %p55 = scmp.eq.s32.totalorder %s15, 0
      %p56 = por %p54, %p55
      %p57 = scmp.ne.s32.totalorder %s49, %s51
      %p58 = scmp.eq.s32.totalorder %s20, 1
      %p59 = por %p57, %p58
      %p60 = scmp.ne.s32.totalorder %s51, %s52
      %p61 = scmp.eq.s32.totalorder %s20, 0
      %p62 = por %p60, %p61
      %p63 = scmp.ne.s32.totalorder %s51, %s52
      %p64 = scmp.eq.s32.totalorder %s21, 1
      %p65 = por %p63, %p64
      %p67 = scmp.ne.s32.totalorder %s52, %s66
      %p68 = scmp.eq.s32.totalorder %s21, 0
      %p69 = por %p67, %p68
      %s70 = ssub.s32 %s15, %s22
      %p71 = scmp.eq.s32.totalorder %s70, 0
      %s73 = sadd.s32 %s72, 1
      %s74 = scalar_select %p71, %s72, %s73
      %p77 = pneg %p71
      %p78 = scmp.eq.s32.totalorder %s15, 1
      %p79 = por %p77, %p78
      %p80 = scmp.ne.s32.totalorder %s72, %s75
      %p81 = scmp.eq.s32.totalorder %s15, 0
      %p82 = por %p80, %p81
      %p83 = scmp.ne.s32.totalorder %s72, %s75
      %p84 = scmp.eq.s32.totalorder %s20, 1
      %p85 = por %p83, %p84
      %p86 = scmp.ne.s32.totalorder %s75, %s76
      %p87 = scmp.eq.s32.totalorder %s20, 0
      %p88 = por %p86, %p87
      %p89 = scmp.ne.s32.totalorder %s75, %s76
      %p90 = scmp.eq.s32.totalorder %s21, 1
      %p91 = por %p89, %p90
      %p93 = scmp.ne.s32.totalorder %s76, %s92
      %p94 = scmp.eq.s32.totalorder %s21, 0
      %p95 = por %p93, %p94
      %p96 = scmp.le.s32.totalorder 1, %s15
      %p97 = scmp.lt.s32.totalorder %s15, 3
      %p98 = pnand %p96, %p97
      %p99 = pneg %p98
      // Predicated region
      $region9: #{tpu_custom_call.1} parent=5 // pred_check
        _
      $region10: #{tpu_custom_call.1} parent=5 // pred_check_branch
        %101 = sbr.rel (%p98) target = $region12
      $region11: #{tpu_custom_call.1} parent=5 // pred_region
        %s102 = ssub.s32 %s15, 1
        // Predicated region
        $region13: #{tpu_custom_call.1} parent=11 // pred_check
          %p103 = pneg %p62
        $region14: #{tpu_custom_call.1} parent=11 // pred_check_branch
          %105 = sbr.rel (%p103) target = $region16
        $region15: #{tpu_custom_call.1} parent=11 // pred_region
          %s107 = ssub.s32 3072, 3072
          %108 = vsyncadd [#allocation6], %s107
          %s109 = sshll.u32 [#allocation5], 4
          %s110 = int_to_ptr.vmem [resolvable:$true] %s109
          %115 = dma.hbm_to_vmem [thread:$0]  %s1, 3072, %s110, [#allocation6], 192, 192, 12
        $region16: #{tpu_custom_call.1} parent=11 // pred_fallthru
          _
      $region12: #{tpu_custom_call.1} parent=5 // pred_fallthru
        _
      %p116 = scmp.lt.s32.totalorder %s15, 2
      // Predicated region
      $region17: #{tpu_custom_call.1} parent=5 // pred_check
        %p117 = pneg %p116
      $region18: #{tpu_custom_call.1} parent=5 // pred_check_branch
        %119 = sbr.rel (%p117) target = $region20
      $region19: #{tpu_custom_call.1} parent=5 // pred_region
        // Predicated region
        $region21: #{tpu_custom_call.1} parent=19 // pred_check
          %p120 = pneg %p35
        $region22: #{tpu_custom_call.1} parent=19 // pred_check_branch
          %122 = sbr.rel (%p120) target = $region24
        $region23: #{tpu_custom_call.1} parent=19 // pred_region
          %s123 = sand.u32 %s25, 1
          %s124 = scalar_lea.sflag [#allocation3], %s123
          %s125 = sand.u32 %s25, 1
          %s126 = smul.addr %s125, 8
          %s127 = scalar_lea.vmem [#allocation2], %s126
          %s129 = ssub.s32 128, 128
          %130 = vsyncadd %s124, %s129
          %s131 = smul.addr %s15, 128
          %s132 = scalar_lea.hbm %s0, %s131
          %s134 = sshll.u32 %s127, 4
          %s135 = int_to_ptr.vmem [resolvable:$true] %s134
          %137 = dma.hbm_to_vmem [thread:$0]  %s132, 128, %s135, %s124
        $region24: #{tpu_custom_call.1} parent=19 // pred_fallthru
          _
      $region20: #{tpu_custom_call.1} parent=5 // pred_fallthru
        _
      %p138 = scmp.le.s32.totalorder 1, %s15
      %p139 = scmp.lt.s32.totalorder %s15, 3
      %p140 = pnand %p138, %p139
      %p141 = pneg %p140
      // Predicated region
      $region25: #{tpu_custom_call.1} parent=5 // pred_check
        _
      $region26: #{tpu_custom_call.1} parent=5 // pred_check_branch
        %143 = sbr.rel (%p140) target = $region28
      $region27: #{tpu_custom_call.1} parent=5 // pred_region
        %s144 = ssub.s32 %s15, 1
        %s145 = sand.u32 %s28, 1
        %s146 = scalar_lea.sflag [#allocation3], %s145
        %s147 = sand.u32 %s28, 1
        %s148 = smul.addr %s147, 8
        %s149 = scalar_lea.vmem [#allocation2], %s148
        // Predicated region
        $region29: #{tpu_custom_call.1} parent=27 // pred_check
          %p150 = pneg %p41
        $region30: #{tpu_custom_call.1} parent=27 // pred_check_branch
          %152 = sbr.rel (%p150) target = $region32
        $region31: #{tpu_custom_call.1} parent=27 // pred_region
          %153 = dma.done %s146, 128
        $region32: #{tpu_custom_call.1} parent=27 // pred_fallthru
          _
        // Predicated region
        $region33: #{tpu_custom_call.1} parent=27 // pred_check
          %p154 = pneg %p62
        $region34: #{tpu_custom_call.1} parent=27 // pred_check_branch
          %156 = sbr.rel (%p154) target = $region36
        $region35: #{tpu_custom_call.1} parent=27 // pred_region
          %157 = dma.done [#allocation6], 3072
        $region36: #{tpu_custom_call.1} parent=27 // pred_fallthru
          _
        %s158 = sand.u32 %s28, 1
        %s159 = scalar_lea.sflag [#allocation3], %s158
        %s160 = sand.u32 %s28, 1
        %s161 = smul.addr %s160, 8
        %s162 = scalar_lea.vmem [#allocation2], %s161
        %p163 = pneg %p41
        %p164 = pneg %p38
        %p165 = pneg %p62
        %p166 = pneg %p59
        %p167 = pneg %p88
        %p168 = pneg %p85
        %s169 = sand.u32 %s75, 1
        %s170 = scalar_lea.sflag [#allocation4], %s169
        %s171 = sand.u32 %s75, 1
        %s172 = smul.addr %s171, 8
        %s173 = scalar_lea.vmem [#allocation7], %s172
        %v175 = vld [vmem:[%s149] sm:$0xff]
        %v176 = vpack.c.bf16 %v175, %v175
        %v177 = vld [vmem:[#allocation5] sm:$0xff]
        %v178 = vld [vmem:[#allocation5 + $0x8] sm:$0xf]
        %v179 = vld [vmem:[#allocation5 + $0xc] sm:$0xff]
        %v180 = vld [vmem:[#allocation5 + $0x14] sm:$0xf]
        %v181 = vld [vmem:[#allocation5 + $0x18] sm:$0xff]
        %v182 = vld [vmem:[#allocation5 + $0x20] sm:$0xf]
        %v183 = vld [vmem:[#allocation5 + $0x24] sm:$0xff]
        %v184 = vld [vmem:[#allocation5 + $0x2c] sm:$0xf]
        %v185 = vld [vmem:[#allocation5 + $0x30] sm:$0xff]
        %v186 = vld [vmem:[#allocation5 + $0x38] sm:$0xf]
        %v187 = vld [vmem:[#allocation5 + $0x3c] sm:$0xff]
        %v188 = vld [vmem:[#allocation5 + $0x44] sm:$0xf]
        %v189 = vld [vmem:[#allocation5 + $0x48] sm:$0xff]
        %v190 = vld [vmem:[#allocation5 + $0x50] sm:$0xf]
        %v191 = vld [vmem:[#allocation5 + $0x54] sm:$0xff]
        %v192 = vld [vmem:[#allocation5 + $0x5c] sm:$0xf]
        %v193 = vld [vmem:[#allocation5 + $0x60] sm:$0xff]
        %v194 = vld [vmem:[#allocation5 + $0x68] sm:$0xf]
        %v195 = vld [vmem:[#allocation5 + $0x6c] sm:$0xff]
        %v196 = vld [vmem:[#allocation5 + $0x74] sm:$0xf]
        %v197 = vld [vmem:[#allocation5 + $0x78] sm:$0xff]
        %v198 = vld [vmem:[#allocation5 + $0x80] sm:$0xf]
        %v199 = vld [vmem:[#allocation5 + $0x84] sm:$0xff]
        %v200 = vld [vmem:[#allocation5 + $0x8c] sm:$0xf]
        %v201 = vld [vmem:[#allocation5 + $0x90] sm:$0xff]
        %v202 = vld [vmem:[#allocation5 + $0x98] sm:$0xf]
        %v203 = vld [vmem:[#allocation5 + $0x9c] sm:$0xff]
        %v204 = vld [vmem:[#allocation5 + $0xa4] sm:$0xf]
        %v205 = vld [vmem:[#allocation5 + $0xa8] sm:$0xff]
        %v206 = vld [vmem:[#allocation5 + $0xb0] sm:$0xf]
        %v207 = vld [vmem:[#allocation5 + $0xb4] sm:$0xff]
        %v208 = vld [vmem:[#allocation5 + $0xbc] sm:$0xf]
        %v241 = vunpack.c.l.b16 %v177
        %v242 = vunpack.c.h.b16 %v177
        %v243 = vunpack.c.l.b16 %v178
        %v244 = vunpack.c.l.b16 %v179
        %v245 = vunpack.c.h.b16 %v179
        %v246 = vunpack.c.l.b16 %v180
        %v247 = vunpack.c.l.b16 %v181
        %v248 = vunpack.c.h.b16 %v181
        %v249 = vunpack.c.l.b16 %v182
        %v250 = vunpack.c.l.b16 %v183
        %v251 = vunpack.c.h.b16 %v183
        %v252 = vunpack.c.l.b16 %v184
        %v253 = vunpack.c.l.b16 %v185
        %v254 = vunpack.c.h.b16 %v185
        %v255 = vunpack.c.l.b16 %v186
        %v256 = vunpack.c.l.b16 %v187
        %v257 = vunpack.c.h.b16 %v187
        %v258 = vunpack.c.l.b16 %v188
        %v259 = vunpack.c.l.b16 %v189
        %v260 = vunpack.c.h.b16 %v189
        %v261 = vunpack.c.l.b16 %v190
        %v262 = vunpack.c.l.b16 %v191
        %v263 = vunpack.c.h.b16 %v191
        %v264 = vunpack.c.l.b16 %v192
        %v265 = vunpack.c.l.b16 %v193
        %v266 = vunpack.c.h.b16 %v193
        %v267 = vunpack.c.l.b16 %v194
        %v268 = vunpack.c.l.b16 %v195
        %v269 = vunpack.c.h.b16 %v195
        %v270 = vunpack.c.l.b16 %v196
        %v271 = vunpack.c.l.b16 %v197
        %v272 = vunpack.c.h.b16 %v197
        %v273 = vunpack.c.l.b16 %v198
        %v274 = vunpack.c.l.b16 %v199
        %v275 = vunpack.c.h.b16 %v199
        %v276 = vunpack.c.l.b16 %v200
        %v277 = vunpack.c.l.b16 %v201
        %v278 = vunpack.c.h.b16 %v201
        %v279 = vunpack.c.l.b16 %v202
        %v280 = vunpack.c.l.b16 %v203
        %v281 = vunpack.c.h.b16 %v203
        %v282 = vunpack.c.l.b16 %v204
        %v283 = vunpack.c.l.b16 %v205
        %v284 = vunpack.c.h.b16 %v205
        %v285 = vunpack.c.l.b16 %v206
        %v286 = vunpack.c.l.b16 %v207
        %v287 = vunpack.c.h.b16 %v207
        %v288 = vunpack.c.l.b16 %v208
        %v289 = vpack.c.b16 %v244, %v241
        %v290 = vpack.c.b16 %v245, %v242
        %v291 = vpack.c.b16 %v246, %v243
        %v292 = vpack.c.b16 %v250, %v247
        %v293 = vpack.c.b16 %v251, %v248
        %v294 = vpack.c.b16 %v252, %v249
        %v295 = vpack.c.b16 %v256, %v253
        %v296 = vpack.c.b16 %v257, %v254
        %v297 = vpack.c.b16 %v258, %v255
        %v298 = vpack.c.b16 %v262, %v259
        %v299 = vpack.c.b16 %v263, %v260
        %v300 = vpack.c.b16 %v264, %v261
        %v301 = vpack.c.b16 %v268, %v265
        %v302 = vpack.c.b16 %v269, %v266
        %v303 = vpack.c.b16 %v270, %v267
        %v304 = vpack.c.b16 %v274, %v271
        %v305 = vpack.c.b16 %v275, %v272
        %v306 = vpack.c.b16 %v276, %v273
        %v307 = vpack.c.b16 %v280, %v277
        %v308 = vpack.c.b16 %v281, %v278
        %v309 = vpack.c.b16 %v282, %v279
        %v310 = vpack.c.b16 %v286, %v283
        %v311 = vpack.c.b16 %v287, %v284
        %v312 = vpack.c.b16 %v288, %v285
        %337 = vmatprep.subr.bf16.mxu0 %v311
        %338 = vmatpush1.bf16.msra.mxu0 %v310
        %339 = vmatprep.subr.bf16.mxu0 %v308
        %340 = vmatpush1.bf16.msra.mxu0 %v307
        %341 = vmatprep.subr.bf16.mxu0 %v305
        %342 = vmatpush1.bf16.msra.mxu0 %v304
        %343 = vmatprep.subr.bf16.mxu0 %v302
        %344 = vmatpush1.bf16.msra.mxu0 %v301
        %345 = vmatprep.subr.bf16.mxu0 %v299
        %346 = vmatpush1.bf16.msra.mxu0 %v298
        %347 = vmatprep.subr.bf16.mxu0 %v296
        %348 = vmatpush1.bf16.msra.mxu0 %v295
        %349 = vmatprep.subr.bf16.mxu0 %v293
        %350 = vmatpush1.bf16.msra.mxu0 %v292
        %351 = vmatprep.subr.bf16.mxu0 %v290
        %352 = vmatpush1.bf16.msra.mxu0 %v289
        %353 = vmatprep.subr.bf16.mxu0 0
        %354 = vmatpush2.bf16.msra.mxu0 0
        %355 = vmatprep.subr.bf16.mxu0 0
        %356 = vmatpush2.bf16.msra.mxu0 0
        %357 = vmatprep.subr.bf16.mxu0 0
        %358 = vmatpush2.bf16.msra.mxu0 0
        %359 = vmatprep.subr.bf16.mxu0 0
        %360 = vmatpush2.bf16.msra.mxu0 0
        %361 = vmatprep.subr.bf16.mxu0 0
        %362 = vmatpush2.bf16.msra.mxu0 0
        %363 = vmatprep.subr.bf16.mxu0 0
        %364 = vmatpush2.bf16.msra.mxu0 0
        %365 = vmatprep.subr.bf16.mxu0 0
        %366 = vmatpush2.bf16.msra.mxu0 0
        %367 = vmatprep.subr.bf16.mxu0 0
        %368 = vmatpush2.bf16.msra.mxu0 0
        %369 = vmatprep.mubr.bf16.mxu0 0
        %370 = vmatmul.mubr.bf16.gmra.mxu0 %v176
        %v371 = vpop.f32.mrf.mxu0
        %v372 = vadd.f32 0.0, %v371
        %v373 = vpop.f32.mrf.mxu0
        %v374 = vadd.f32 0.0, %v373
        %v375 = vpop.f32.mrf.mxu0
        %v376 = vpop.f32.mrf.mxu0
        %377 = vdwg.mxu0
        %378 = vmatprep.subr.bf16.mxu0 0
        %379 = vmatpush1.bf16.msra.mxu0 %v312
        %380 = vmatprep.subr.bf16.mxu0 0
        %381 = vmatpush1.bf16.msra.mxu0 %v309
        %382 = vmatprep.subr.bf16.mxu0 0
        %383 = vmatpush1.bf16.msra.mxu0 %v306
        %384 = vmatprep.subr.bf16.mxu0 0
        %385 = vmatpush1.bf16.msra.mxu0 %v303
        %386 = vmatprep.subr.bf16.mxu0 0
        %387 = vmatpush1.bf16.msra.mxu0 %v300
        %388 = vmatprep.subr.bf16.mxu0 0
        %389 = vmatpush1.bf16.msra.mxu0 %v297
        %390 = vmatprep.subr.bf16.mxu0 0
        %391 = vmatpush1.bf16.msra.mxu0 %v294
        %392 = vmatprep.subr.bf16.mxu0 0
        %393 = vmatpush1.bf16.msra.mxu0 %v291
        %394 = vmatprep.subr.bf16.mxu0 0
        %395 = vmatpush2.bf16.msra.mxu0 0
        %396 = vmatprep.subr.bf16.mxu0 0
        %397 = vmatpush2.bf16.msra.mxu0 0
        %398 = vmatprep.subr.bf16.mxu0 0
        %399 = vmatpush2.bf16.msra.mxu0 0
        %400 = vmatprep.subr.bf16.mxu0 0
        %401 = vmatpush2.bf16.msra.mxu0 0
        %402 = vmatprep.subr.bf16.mxu0 0
        %403 = vmatpush2.bf16.msra.mxu0 0
        %404 = vmatprep.subr.bf16.mxu0 0
        %405 = vmatpush2.bf16.msra.mxu0 0
        %406 = vmatprep.subr.bf16.mxu0 0
        %407 = vmatpush2.bf16.msra.mxu0 0
        %408 = vmatprep.subr.bf16.mxu0 0
        %409 = vmatpush2.bf16.msra.mxu0 0
        %410 = vmatprep.mubr.bf16.mxu0 0
        %411 = vmatmul.mubr.bf16.gmra.mxu0 %v176
        %v412 = vpop.f32.mrf.mxu0
        %v413 = vadd.f32 0.0, %v412
        %v414 = vpop.f32.mrf.mxu0
        %v415 = vpop.f32.mrf.mxu0
        %v416 = vpop.f32.mrf.mxu0
        %417 = vdwg.mxu0
        %v418 = vpack.c.bf16 %v372, %v372
        %v419 = vpack.c.bf16 %v374, %v374
        %420 = vmatprep.subr.bf16.mxu0 0
        %421 = vmatpush1.bf16.xpose.msra.mxu0 0
        %422 = vmatprep.subr.bf16.mxu0 0
        %423 = vmatpush1.bf16.xpose.msra.mxu0 0
        %424 = vmatprep.subr.bf16.mxu0 0
        %425 = vmatpush1.bf16.xpose.msra.mxu0 0
        %426 = vmatprep.subr.bf16.mxu0 0
        %427 = vmatpush1.bf16.xpose.msra.mxu0 0
        %428 = vmatprep.subr.bf16.mxu0 0
        %429 = vmatpush1.bf16.xpose.msra.mxu0 0
        %430 = vmatprep.subr.bf16.mxu0 0
        %431 = vmatpush1.bf16.xpose.msra.mxu0 0
        %432 = vmatprep.subr.bf16.mxu0 0
        %433 = vmatpush1.bf16.xpose.msra.mxu0 0
        %434 = vmatprep.subr.bf16.mxu0 0
        %435 = vmatpush1.bf16.xpose.msra.mxu0 %v419
        %436 = vmatprep.subr.bf16.mxu0 0
        %437 = vmatpush2.bf16.xpose.msra.mxu0 0
        %438 = vmatprep.subr.bf16.mxu0 0
        %439 = vmatpush2.bf16.xpose.msra.mxu0 0
        %440 = vmatprep.subr.bf16.mxu0 0
        %441 = vmatpush2.bf16.xpose.msra.mxu0 0
        %442 = vmatprep.subr.bf16.mxu0 0
        %443 = vmatpush2.bf16.xpose.msra.mxu0 0
        %444 = vmatprep.subr.bf16.mxu0 0
        %445 = vmatpush2.bf16.xpose.msra.mxu0 0
        %446 = vmatprep.subr.bf16.mxu0 0
        %447 = vmatpush2.bf16.xpose.msra.mxu0 0
        %448 = vmatprep.subr.bf16.mxu0 0
        %449 = vmatpush2.bf16.xpose.msra.mxu0 0
        %450 = vmatprep.subr.bf16.mxu0 0
        %451 = vmatpush2.bf16.xpose.msra.mxu0 0
        %452 = vmatprep.mubr.bf16.mxu0 0
        %453 = vmatmul.mubr.bf16.gmra.mxu0 %v418
        %v454 = vpop.f32.mrf.mxu0
        %v455 = vadd.f32 0.0, %v454
        %v456 = vpop.f32.mrf.mxu0
        %v457 = vpop.f32.mrf.mxu0
        %v458 = vpop.f32.mrf.mxu0
        %459 = vdwg.mxu0
        %vm460 = vcmask 64512
        %v461 = vsel %vm460, %v455, -inf
        %462 = vmax.xlane.f32.xlu0 %v461
        %v463 = vpop.xlane.xlu0 %462
        %v464 = vsub.f32 %v455, %v463
        %v465 = vmul.f32 %v464, 1.442695
        %v466 = vpow.pop %v465
        %v467 = vsel %vm460, %v466, 0.0
        %468 = vadd.xlane.f32.xlu0 %v467
        %v469 = vpop.xlane.xlu0 %468
        %v470 = vrcp.pop %v469
        %v471 = vpack.c.bf16 %v466, %v466
        %v472 = vpack.c.bf16 %v413, %v413
        %v474 = vsel %vm460, %v471, 0
        %vm476 = vcmask 1043456
        %v478 = vsel %vm476, %v472, 0
        %480 = vmatprep.subr.bf16.mxu0 0
        %481 = vmatpush1.bf16.msra.mxu0 0
        %482 = vmatprep.subr.bf16.mxu0 0
        %483 = vmatpush1.bf16.msra.mxu0 0
        %484 = vmatprep.subr.bf16.mxu0 0
        %485 = vmatpush1.bf16.msra.mxu0 0
        %486 = vmatprep.subr.bf16.mxu0 0
        %487 = vmatpush1.bf16.msra.mxu0 0
        %488 = vmatprep.subr.bf16.mxu0 0
        %489 = vmatpush1.bf16.msra.mxu0 0
        %490 = vmatprep.subr.bf16.mxu0 0
        %491 = vmatpush1.bf16.msra.mxu0 0
        %492 = vmatprep.subr.bf16.mxu0 0
        %493 = vmatpush1.bf16.msra.mxu0 0
        %494 = vmatprep.subr.bf16.mxu0 0
        %495 = vmatpush1.bf16.msra.mxu0 %v478
        %496 = vmatprep.subr.bf16.mxu0 0
        %497 = vmatpush2.bf16.msra.mxu0 0
        %498 = vmatprep.subr.bf16.mxu0 0
        %499 = vmatpush2.bf16.msra.mxu0 0
        %500 = vmatprep.subr.bf16.mxu0 0
        %501 = vmatpush2.bf16.msra.mxu0 0
        %502 = vmatprep.subr.bf16.mxu0 0
        %503 = vmatpush2.bf16.msra.mxu0 0
        %504 = vmatprep.subr.bf16.mxu0 0
        %505 = vmatpush2.bf16.msra.mxu0 0
        %506 = vmatprep.subr.bf16.mxu0 0
        %507 = vmatpush2.bf16.msra.mxu0 0
        %508 = vmatprep.subr.bf16.mxu0 0
        %509 = vmatpush2.bf16.msra.mxu0 0
        %510 = vmatprep.subr.bf16.mxu0 0
        %511 = vmatpush2.bf16.msra.mxu0 0
        %512 = vmatprep.mubr.bf16.mxu0 0
        %513 = vmatmul.mubr.bf16.gmra.mxu0 %v474
        %v514 = vpop.f32.mrf.mxu0
        %v515 = vadd.f32 0.0, %v514
        %v516 = vpop.f32.mrf.mxu0
        %v517 = vpop.f32.mrf.mxu0
        %v518 = vpop.f32.mrf.mxu0
        %519 = vdwg.mxu0
        %v520 = vmul.f32 %v515, %v470
        %521 = vst [vmem:[%s173] sm:$0xff] %v520
        %s522 = sand.u32 %s75, 1
        %s523 = scalar_lea.sflag [#allocation4], %s522
        %s524 = sand.u32 %s75, 1
        %s525 = smul.addr %s524, 8
        %s526 = scalar_lea.vmem [#allocation7], %s525
        // Predicated region
        $region37: #{tpu_custom_call.1} parent=27 // pred_check
          %p527 = pneg %p85
        $region38: #{tpu_custom_call.1} parent=27 // pred_check_branch
          %529 = sbr.rel (%p527) target = $region40
        $region39: #{tpu_custom_call.1} parent=27 // pred_region
          %s531 = ssub.s32 128, 128
          %532 = vsyncadd %s523, %s531
          %s533 = smul.addr %s20, 128
          %s534 = scalar_lea.hbm %s2, %s533
          %s536 = sshll.u32 %s526, 4
          %s537 = int_to_ptr.vmem [resolvable:$true] %s536
          %539 = dma.vmem_to_hbm [thread:$0]  %s537, 128, %s534, %s523
        $region40: #{tpu_custom_call.1} parent=27 // pred_fallthru
          _
      $region28: #{tpu_custom_call.1} parent=5 // pred_fallthru
        _
      %p540 = scmp.le.s32.totalorder 2, %s15
      // Predicated region
      $region41: #{tpu_custom_call.1} parent=5 // pred_check
        %p541 = pneg %p540
      $region42: #{tpu_custom_call.1} parent=5 // pred_check_branch
        %543 = sbr.rel (%p541) target = $region44
      $region43: #{tpu_custom_call.1} parent=5 // pred_region
        %s544 = ssub.s32 %s15, 2
        // Predicated region
        $region45: #{tpu_custom_call.1} parent=43 // pred_check
          %p545 = pneg %p91
        $region46: #{tpu_custom_call.1} parent=43 // pred_check_branch
          %547 = sbr.rel (%p545) target = $region48
        $region47: #{tpu_custom_call.1} parent=43 // pred_region
          %s548 = sand.u32 %s76, 1
          %s549 = scalar_lea.sflag [#allocation4], %s548
          %s550 = sand.u32 %s76, 1
          %s551 = smul.addr %s550, 8
          %s552 = scalar_lea.vmem [#allocation7], %s551
          %553 = dma.done %s549, 128
        $region48: #{tpu_custom_call.1} parent=43 // pred_fallthru
          _
      $region44: #{tpu_custom_call.1} parent=5 // pred_fallthru
        _
    $region6: #{tpu_custom_call.1} parent=1 // loop_footer
      %s19 = sadd.s32 1, %s15
    $region7: #{tpu_custom_call.1} parent=1 // loop_footer_branch
      %14 = sbr.rel target = $region3
    $region8: #{tpu_custom_call.1} parent=1 // loop_exit
      _
    %554 = vsyncpa [#allocation3], 1
    %s555 = scalar_lea.sflag [#allocation3], 1
    %556 = vsyncpa %s555, 1
    %557 = vsyncpa [#allocation6], 1
    %558 = vsyncpa [#allocation4], 1
    %s559 = scalar_lea.sflag [#allocation4], 1
    %560 = vsyncpa %s559, 1

</llo_original>
